<compile_context>
chip_gen: v5e
topology: v5e:2x2
jax: 0.10.0
libtpu: 0.0.40
codegen_flags: <defaults>
</compile_context>

<pallas_src>
import functools

import jax
import jax.numpy as jnp
from jax.experimental import pallas as pl
from jax.experimental.pallas import tpu as pltpu


def _state_mlp_kernel(x_ref, w1_ref, b1_ref, w2_ref, b2_ref, o_ref):
    # hidden = relu(x @ W1 + b1), accumulated in f32 on the MXU.
    h = jnp.dot(x_ref[...], w1_ref[...], preferred_element_type=jnp.float32)
    h = jnp.maximum(h + b1_ref[...], 0.0)        # b1 is (1, H): broadcasts over rows
    # out = hidden @ W2 + b2
    h = h.astype(w2_ref.dtype)                   # bf16 path feeds the MXU in bf16
    y = jnp.dot(h, w2_ref[...], preferred_element_type=jnp.float32)
    y = y + b2_ref[...]
    o_ref[...] = y.astype(o_ref.dtype)


def _round_up(x, m):
    return -(-x // m) * m


@functools.partial(jax.jit, static_argnames=("block_rows", "compute_dtype"))
def state_encoder_forward(state, w1, b1, w2, b2, *, block_rows=4096,
                          compute_dtype=jnp.float32):
    """state: (B, D_in) f32.  Returns (B, D_out) f32 = Linear -> ReLU -> Linear."""
    B, D_in = state.shape
    H = w1.shape[1]
    D_out = w2.shape[1]
    assert w1.shape == (D_in, H) and b1.shape == (H,)
    assert w2.shape == (H, D_out) and b2.shape == (D_out,)

    # Lane-packing factor: merge `pack` consecutive batch rows per output row so
    # the kernel's output last dim is 128 (full lane width -> unmasked stores).
    pack = 128 // D_out if (D_out < 128 and 128 % D_out == 0) else 1

    # Block-diagonal ("kron") weights implement the packed math with plain GEMMs;
    # the off-diagonal blocks are exact zeros, so numerics are unchanged.
    eye = jnp.eye(pack, dtype=w1.dtype)
    w1p = jnp.kron(eye, w1).astype(compute_dtype)            # (pack*D_in, pack*H)
    w2p = jnp.kron(eye, w2).astype(compute_dtype)            # (pack*H, pack*D_out)
    b1p = jnp.tile(b1, pack).reshape(1, pack * H).astype(jnp.float32)
    b2p = jnp.tile(b2, pack).reshape(1, pack * D_out).astype(jnp.float32)

    # Batch tiling in packed-row space; pad so the grid divides evenly.
    rows = pl.cdiv(B, pack)
    tm = max(8, min((block_rows // pack) // 8 * 8, _round_up(rows, 8)))
    rows_padded = _round_up(rows, tm)
    b_padded = rows_padded * pack

    x = state.astype(compute_dtype)
    if b_padded != B:
        x = jnp.pad(x, ((0, b_padded - B), (0, 0)))
    x2 = x.reshape(rows_padded, pack * D_in)   # contiguous row-major reshape

    out2 = pl.pallas_call(
        _state_mlp_kernel,
        out_shape=jax.ShapeDtypeStruct((rows_padded, pack * D_out), jnp.float32),
        grid=(rows_padded // tm,),
        in_specs=[
            pl.BlockSpec((tm, pack * D_in), lambda i: (i, 0)),         # streamed
            pl.BlockSpec((pack * D_in, pack * H), lambda i: (0, 0)),    # resident
            pl.BlockSpec((1, pack * H), lambda i: (0, 0)),              # resident
            pl.BlockSpec((pack * H, pack * D_out), lambda i: (0, 0)),   # resident
            pl.BlockSpec((1, pack * D_out), lambda i: (0, 0)),          # resident
        ],
        out_specs=pl.BlockSpec((tm, pack * D_out), lambda i: (i, 0)),
        compiler_params=pltpu.CompilerParams(
            # Batch tiles are independent: shard across TensorCores (2 on v7x).
            dimension_semantics=("parallel",),
        ),
    )(x2, w1p, b1p, w2p, b2p)

    out = out2.reshape(b_padded, D_out)
    return out[:B] if b_padded != B else out


def init_params(key, state_dim, hidden=64, out_dim=64):
    """Deterministic synthetic init mimicking nn.Linear (uniform +/- 1/sqrt(fan_in))."""
    k1, k2, k3, k4 = jax.random.split(key, 4)
    lim1 = 1.0 / jnp.sqrt(state_dim)
    lim2 = 1.0 / jnp.sqrt(hidden)
    # Stored already transposed: (in, out), so the kernel computes x @ W directly.
    w1 = jax.random.uniform(k1, (state_dim, hidden), jnp.float32, -lim1, lim1)
    b1 = jax.random.uniform(k2, (hidden,), jnp.float32, -lim1, lim1)
    w2 = jax.random.uniform(k3, (hidden, out_dim), jnp.float32, -lim2, lim2)
    b2 = jax.random.uniform(k4, (out_dim,), jnp.float32, -lim2, lim2)
    return w1, b1, w2, b2


if __name__ == "__main__":
    key = jax.random.PRNGKey(0)
    k_state, k_params = jax.random.split(key)

    B = 8            # batch (tiny smoke test; the kernel tiles any B)
    STATE_DIM = 32   # observation_space['full_state'][0]
    HIDDEN = 64      # state_mlp_size[0]
    OUT = 64         # state_mlp_size[-1] (output_dim)

    observations = {
        "full_state": jax.random.normal(k_state, (B, STATE_DIM), jnp.float32)
    }
    w1, b1, w2, b2 = init_params(k_params, STATE_DIM, HIDDEN, OUT)

    state = observations["full_state"]            # StateEncoder.forward key select
    ref = jnp.maximum(state @ w1 + b1, 0.0) @ w2 + b2

    # f32 path: exact parity with the PyTorch module.
    out = state_encoder_forward(state, w1, b1, w2, b2)
    out = jax.block_until_ready(out)
    assert out.shape == (B, OUT)
    assert jnp.allclose(out, ref, atol=1e-5, rtol=1e-5)

    # bf16-input / f32-accumulate path (v6e/v7x MXU-native, halves HBM traffic).
    out_bf16 = state_encoder_forward(state, w1, b1, w2, b2,
                                     compute_dtype=jnp.bfloat16)
    out_bf16 = jax.block_until_ready(out_bf16)
    assert out_bf16.shape == (B, OUT)
    assert jnp.allclose(out_bf16, ref, atol=1e-1, rtol=1e-1)

    print("KERNEL_OK")
</pallas_src>

<mosaic_0001>
module attributes {stable_mosaic.version = 11 : i64} {
  func.func @_state_mlp_kernel(%arg0: i32, %arg1: memref<8x64xf32, #tpu.memory_space<vmem>>, %arg2: memref<64x128xf32, #tpu.memory_space<vmem>>, %arg3: memref<1x128xf32, #tpu.memory_space<vmem>>, %arg4: memref<128x128xf32, #tpu.memory_space<vmem>>, %arg5: memref<1x128xf32, #tpu.memory_space<vmem>>, %arg6: memref<8x128xf32, #tpu.memory_space<vmem>>) attributes {dimension_semantics = [#tpu.dimension_semantics<parallel>], iteration_bounds = array<i64: 1>, scalar_prefetch = 0 : i64, scratch_operands = 0 : i64, tpu.core_type = #tpu.core_type<tc>, window_params = [{transform_indices = @transform_0, window_bounds = array<i64: 8, 64>}, {pipeline_mode = #tpu.pipeline_mode<synchronous>, transform_indices = @transform_1, window_bounds = array<i64: 64, 128>}, {pipeline_mode = #tpu.pipeline_mode<synchronous>, transform_indices = @transform_2, window_bounds = array<i64: 1, 128>}, {pipeline_mode = #tpu.pipeline_mode<synchronous>, transform_indices = @transform_3, window_bounds = array<i64: 128, 128>}, {pipeline_mode = #tpu.pipeline_mode<synchronous>, transform_indices = @transform_4, window_bounds = array<i64: 1, 128>}, {transform_indices = @transform_5, window_bounds = array<i64: 8, 128>}]} {
    %c0 = arith.constant 0 : index
    %c0_0 = arith.constant 0 : index
    %0 = vector.load %arg1[%c0, %c0_0] : memref<8x64xf32, #tpu.memory_space<vmem>>, vector<8x64xf32>
    %c0_1 = arith.constant 0 : index
    %c0_2 = arith.constant 0 : index
    %1 = vector.load %arg2[%c0_1, %c0_2] : memref<64x128xf32, #tpu.memory_space<vmem>>, vector<64x128xf32>
    %cst = arith.constant dense<0.000000e+00> : vector<8x128xf32>
    %2 = tpu.matmul %0, %1, %cst {dimension_numbers = #tpu.dot_dimension_numbers<[1], [0], [0], [1], [0, 0, 1, 1], [], []>} : vector<8x64xf32>, vector<64x128xf32>, vector<8x128xf32> -> vector<8x128xf32>
    %c0_3 = arith.constant 0 : index
    %c0_4 = arith.constant 0 : index
    %3 = vector.load %arg3[%c0_3, %c0_4] : memref<1x128xf32, #tpu.memory_space<vmem>>, vector<1x128xf32>
    %4 = vector.broadcast %3 : vector<1x128xf32> to vector<8x128xf32>
    %5 = arith.addf %2, %4 : vector<8x128xf32>
    %cst_5 = arith.constant 0.000000e+00 : f32
    %6 = vector.broadcast %cst_5 : f32 to vector<8x128xf32>
    %7 = arith.maximumf %5, %6 : vector<8x128xf32>
    %c0_6 = arith.constant 0 : index
    %c0_7 = arith.constant 0 : index
    %8 = vector.load %arg4[%c0_6, %c0_7] : memref<128x128xf32, #tpu.memory_space<vmem>>, vector<128x128xf32>
    %cst_8 = arith.constant dense<0.000000e+00> : vector<8x128xf32>
    %9 = tpu.matmul %7, %8, %cst_8 {dimension_numbers = #tpu.dot_dimension_numbers<[1], [0], [0], [1], [0, 0, 1, 1], [], []>} : vector<8x128xf32>, vector<128x128xf32>, vector<8x128xf32> -> vector<8x128xf32>
    %c0_9 = arith.constant 0 : index
    %c0_10 = arith.constant 0 : index
    %10 = vector.load %arg5[%c0_9, %c0_10] : memref<1x128xf32, #tpu.memory_space<vmem>>, vector<1x128xf32>
    %11 = vector.broadcast %10 : vector<1x128xf32> to vector<8x128xf32>
    %12 = arith.addf %9, %11 : vector<8x128xf32>
    %c0_11 = arith.constant 0 : index
    %c0_12 = arith.constant 0 : index
    %13 = vector.load %arg6[%c0_11, %c0_12] : memref<8x128xf32, #tpu.memory_space<vmem>>, vector<8x128xf32>
    tpu.vector_store %arg6[%c0_11, %c0_12], %12 {strides = array<i32>} : memref<8x128xf32, #tpu.memory_space<vmem>>, vector<8x128xf32>,
    return
  }
  func.func @transform_0(%arg0: i32) -> (i32, i32) {
    %c0_i32 = arith.constant 0 : i32
    %c0_i32_0 = arith.constant 0 : i32
    return %arg0, %c0_i32 : i32, i32
  }
  func.func @transform_1(%arg0: i32) -> (i32, i32) {
    %c0_i32 = arith.constant 0 : i32
    %c0_i32_0 = arith.constant 0 : i32
    %c0_i32_1 = arith.constant 0 : i32
    return %c0_i32, %c0_i32_0 : i32, i32
  }
  func.func @transform_2(%arg0: i32) -> (i32, i32) {
    %c0_i32 = arith.constant 0 : i32
    %c0_i32_0 = arith.constant 0 : i32
    %c0_i32_1 = arith.constant 0 : i32
    return %c0_i32, %c0_i32_0 : i32, i32
  }
  func.func @transform_3(%arg0: i32) -> (i32, i32) {
    %c0_i32 = arith.constant 0 : i32
    %c0_i32_0 = arith.constant 0 : i32
    %c0_i32_1 = arith.constant 0 : i32
    return %c0_i32, %c0_i32_0 : i32, i32
  }
  func.func @transform_4(%arg0: i32) -> (i32, i32) {
    %c0_i32 = arith.constant 0 : i32
    %c0_i32_0 = arith.constant 0 : i32
    %c0_i32_1 = arith.constant 0 : i32
    return %c0_i32, %c0_i32_0 : i32, i32
  }
  func.func @transform_5(%arg0: i32) -> (i32, i32) {
    %c0_i32 = arith.constant 0 : i32
    %c0_i32_0 = arith.constant 0 : i32
    return %arg0, %c0_i32 : i32, i32
  }
}

</mosaic_0001>

<llo_original>
// kernel: tile.13
$region0: #{tile.13}
  #allocation0 [shape = 's32[1]{0}', space=sflag, size = 0x4, scoped, tag = 'scoped memory for tile.13']
  %s0 = inlined_call_operand.vmem [shape: f32[64], index: 0, kind: input, shape index: {}]
  %s1 = inlined_call_operand.vmem [shape: f32[2,64], index: 1, kind: output, shape index: {}]
  // Predicated region
  $region2: #{tile.13} parent=0 // pred_check
    _
  $region3: #{tile.13} parent=0 // pred_check_branch
    %3 = sbr.rel (0) target = $region5
  $region4: #{tile.13} parent=0 // pred_region
    _
  $region5: #{tile.13} parent=0 // pred_fallthru
    _
  %v4 = vld [vmem:[%s0] ss:$0 sm:$0xff]
  %5 = vst [vmem:[%s1] sm:$0x3] %v4

// kernel: tile.14
$region0: #{tile.14}
  %s0 = inlined_call_operand.vmem [shape: f32[2,64], index: 0, kind: input, shape index: {}]
  %s1 = inlined_call_operand.vmem [shape: f32[1,128], index: 1, kind: output, shape index: {}]
  $region1: #{tile.14} parent=0
    #allocation0 [shape = 'u8[4096]{0}', space=vmem, size = 0x1000, scoped, tag = 'scoped mem for output reshape']
    #allocation1 [shape = 'u8[4096]{0}', space=vmem, size = 0x1000, scoped, tag = 'scoped mem for input reshape']
    %s3 = ssub.s32 4, 1
    %v4 = vld [vmem:[%s0] sm:%s3]
    %5 = vst [vmem:[#allocation1] sm:%s3] %v4
    %v6 = vld [vmem:[#allocation1] sm:$0x1]
    %vm7 = vcmask 523264
    %8 = vst.msk [vmem:[#allocation0] sm:$0x1] %vm7, %v6
    %s9 = scalar_lea.vmem [#allocation1], 1
    %v10 = vld [vmem:[%s9] sm:$0x1]
    %11 = vrot.lane.b32.xlu0 %v10, 64
    %v12 = vpop.permute.xlu0 %11
    %vm13 = vcmask 1048064
    %14 = vst.msk [vmem:[#allocation0] sm:$0x1] %vm13, %v12
    %s16 = ssub.s32 2, 1
    %v17 = vld [vmem:[#allocation0] sm:%s16]
    %s19 = ssub.s32 2, 1
    %20 = vst [vmem:[%s1] sm:%s19] %v17

// kernel: state_encoder_forward.1
$region0: #{state_encoder_forward.1}
  #allocation0 [shape = 'u32[]', space=smem, size = 0x4, offset = 0x4, fixed_abs, tag = 'smem constant byte address 0x4 - core index']
  #allocation1 [shape = 'u32[72,128]{1,0:T(1,128)}', space=vmem, size = 0x9000, scoped, tag = 'internal scratch']
  %s0 = inlined_call_operand.vmem [shape: f32[8,64], index: 0, kind: input, shape index: {}]
  %s1 = inlined_call_operand.vmem [shape: f32[64,128], index: 1, kind: input, shape index: {}]
  %s2 = inlined_call_operand.vmem [shape: f32[1,128], index: 2, kind: input, shape index: {}]
  %s3 = inlined_call_operand.vmem [shape: f32[128,128], index: 3, kind: input, shape index: {}]
  %s4 = inlined_call_operand.vmem [shape: f32[1,128], index: 4, kind: input, shape index: {}]
  %s5 = inlined_call_operand.vmem [shape: f32[8,128], index: 5, kind: output, shape index: {}]
  %s6 = sld [smem:[#allocation0]]
  $region30: #{state_encoder_forward.1} parent=0
    _
  %s8 = ssub.s32 1, %s6
  %s9 = scalar_select 0, %s8, %s6
  // Predicated region
  $region2: #{state_encoder_forward.1} parent=0 // pred_check
    _
  $region3: #{state_encoder_forward.1} parent=0 // pred_check_branch
    %11 = sbr.rel (0) target = $region5
  $region4: #{state_encoder_forward.1} parent=0 // pred_region
    _
  $region5: #{state_encoder_forward.1} parent=0 // pred_fallthru
    _
  // Predicated region
  $region6: #{state_encoder_forward.1} parent=0 // pred_check
    _
  $region7: #{state_encoder_forward.1} parent=0 // pred_check_branch
    %13 = sbr.rel (0) target = $region9
  $region8: #{state_encoder_forward.1} parent=0 // pred_region
    _
  $region9: #{state_encoder_forward.1} parent=0 // pred_fallthru
    _
  // Predicated region
  $region10: #{state_encoder_forward.1} parent=0 // pred_check
    _
  $region11: #{state_encoder_forward.1} parent=0 // pred_check_branch
    %15 = sbr.rel (0) target = $region13
  $region12: #{state_encoder_forward.1} parent=0 // pred_region
    _
  $region13: #{state_encoder_forward.1} parent=0 // pred_fallthru
    _
  // Predicated region
  $region14: #{state_encoder_forward.1} parent=0 // pred_check
    _
  $region15: #{state_encoder_forward.1} parent=0 // pred_check_branch
    %17 = sbr.rel (0) target = $region17
  $region16: #{state_encoder_forward.1} parent=0 // pred_region
    _
  $region17: #{state_encoder_forward.1} parent=0 // pred_fallthru
    _
  // Predicated region
  $region18: #{state_encoder_forward.1} parent=0 // pred_check
    _
  $region19: #{state_encoder_forward.1} parent=0 // pred_check_branch
    %19 = sbr.rel (0) target = $region21
  $region20: #{state_encoder_forward.1} parent=0 // pred_region
    _
  $region21: #{state_encoder_forward.1} parent=0 // pred_fallthru
    _
  %v20 = vld [vmem:[%s0] sm:$0xff]
  %v21 = vld [vmem:[%s1] sm:$0xff]
  %v22 = vld [vmem:[%s1 + $0x8] sm:$0xff]
  %v23 = vld [vmem:[%s1 + $0x10] sm:$0xff]
  %v24 = vld [vmem:[%s1 + $0x18] sm:$0xff]
  %v25 = vld [vmem:[%s1 + $0x20] sm:$0xff]
  %v26 = vld [vmem:[%s1 + $0x28] sm:$0xff]
  %v27 = vld [vmem:[%s1 + $0x30] sm:$0xff]
  %v28 = vld [vmem:[%s1 + $0x38] sm:$0xff]
  %v29 = vld [vmem:[%s2] sm:$0x1]
  %v31 = vperm.slane %v29, 0
  %vm33 = vcmask 523264
  %v35 = vsel %vm33, %v20, 0
  %37 = vmatpush.msra.mxu0 0.0
  %38 = vmatpush.msra.mxu0 0.0
  %39 = vmatpush.msra.mxu0 0.0
  %40 = vmatpush.msra.mxu0 0.0
  %41 = vmatpush.msra.mxu0 0.0
  %42 = vmatpush.msra.mxu0 0.0
  %43 = vmatpush.msra.mxu0 0.0
  %44 = vmatpush.msra.mxu0 0.0
  %45 = vmatpush.msra.mxu0 %v28
  %46 = vmatpush.msra.mxu0 %v27
  %47 = vmatpush.msra.mxu0 %v26
  %48 = vmatpush.msra.mxu0 %v25
  %49 = vmatpush.msra.mxu0 %v24
  %50 = vmatpush.msra.mxu0 %v23
  %51 = vmatpush.msra.mxu0 %v22
  %52 = vmatpush.msra.mxu0 %v21
  %53 = vmatmul.f32.gmra.mxu0 %v35
  %v54 = vpop.f32.mrf.mxu0
  %v55 = vadd.f32 %v31, %v54
  %56 = vdwg.mxu0
  %v57 = vmax.f32 %v55, 0.0
  %v58 = vld [vmem:[%s3] sm:$0xff]
  %v59 = vld [vmem:[%s3 + $0x8] sm:$0xff]
  %v60 = vld [vmem:[%s3 + $0x10] sm:$0xff]
  %v61 = vld [vmem:[%s3 + $0x18] sm:$0xff]
  %v62 = vld [vmem:[%s3 + $0x20] sm:$0xff]
  %v63 = vld [vmem:[%s3 + $0x28] sm:$0xff]
  %v64 = vld [vmem:[%s3 + $0x30] sm:$0xff]
  %v65 = vld [vmem:[%s3 + $0x38] sm:$0xff]
  %v66 = vld [vmem:[%s3 + $0x40] sm:$0xff]
  %v67 = vld [vmem:[%s3 + $0x48] sm:$0xff]
  %v68 = vld [vmem:[%s3 + $0x50] sm:$0xff]
  %v69 = vld [vmem:[%s3 + $0x58] sm:$0xff]
  %v70 = vld [vmem:[%s3 + $0x60] sm:$0xff]
  %v71 = vld [vmem:[%s3 + $0x68] sm:$0xff]
  %v72 = vld [vmem:[%s3 + $0x70] sm:$0xff]
  %v73 = vld [vmem:[%s3 + $0x78] sm:$0xff]
  %v74 = vld [vmem:[%s4] sm:$0x1]
  %v76 = vperm.slane %v74, 0
  %78 = vmatpush.msra.mxu0 %v73
  %79 = vmatpush.msra.mxu0 %v72
  %80 = vmatpush.msra.mxu0 %v71
  %81 = vmatpush.msra.mxu0 %v70
  %82 = vmatpush.msra.mxu0 %v69
  %83 = vmatpush.msra.mxu0 %v68
  %84 = vmatpush.msra.mxu0 %v67
  %85 = vmatpush.msra.mxu0 %v66
  %86 = vmatpush.msra.mxu0 %v65
  %87 = vmatpush.msra.mxu0 %v64
  %88 = vmatpush.msra.mxu0 %v63
  %89 = vmatpush.msra.mxu0 %v62
  %90 = vmatpush.msra.mxu0 %v61
  %91 = vmatpush.msra.mxu0 %v60
  %92 = vmatpush.msra.mxu0 %v59
  %93 = vmatpush.msra.mxu0 %v58
  %94 = vmatmul.f32.gmra.mxu0 %v57
  %v95 = vpop.f32.mrf.mxu0
  %v96 = vadd.f32 %v76, %v95
  %97 = vdwg.mxu0
  %98 = vst [vmem:[%s5] sm:$0xff] %v96
  // Predicated region
  $region22: #{state_encoder_forward.1} parent=0 // pred_check
    _
  $region23: #{state_encoder_forward.1} parent=0 // pred_check_branch
    %100 = sbr.rel (0) target = $region25
  $region24: #{state_encoder_forward.1} parent=0 // pred_region
    _
  $region25: #{state_encoder_forward.1} parent=0 // pred_fallthru
    _
  // Predicated region
  $region26: #{state_encoder_forward.1} parent=0 // pred_check
    _
  $region27: #{state_encoder_forward.1} parent=0 // pred_check_branch
    %102 = sbr.rel (0) target = $region29
  $region28: #{state_encoder_forward.1} parent=0 // pred_region
    _
  $region29: #{state_encoder_forward.1} parent=0 // pred_fallthru
    _

</llo_original>
